<compile_context>
chip_gen: v6e
topology: v6e:2x2x1
jax: 0.10.0
libtpu: 0.0.40
codegen_flags: <defaults>
</compile_context>

<pallas_src>
import functools

import jax
import jax.numpy as jnp
from jax import lax
from jax.experimental import pallas as pl
from jax.experimental.pallas import tpu as pltpu

_EPS = 1e-12          # F.normalize default eps (clamp on the L2 norm)
_LANE = 128
_SUBLANE = 8
_LANE_CHUNK = 1024    # lanes per f32 slab inside the general kernel


# ---------------------------------------------------------------------------
# Kernels
# ---------------------------------------------------------------------------

def _rmsnorm_kernel(x_ref, o_ref, *, scale):
    """General path: per-row L2 over the (full-extent) last axis.

    Squared-sum and store are processed in lane chunks read from the VMEM ref,
    so no full [br, dim] f32 temporary is ever required.
    """
    br, d = x_ref.shape
    ss = jnp.zeros((br, 1), dtype=jnp.float32)
    for s in range(0, d, _LANE_CHUNK):
        e = min(s + _LANE_CHUNK, d)
        c = x_ref[:, s:e].astype(jnp.float32)
        ss = ss + jnp.sum(c * c, axis=-1, keepdims=True)
    # max(sqrt(ss), eps) == sqrt(max(ss, eps^2)); rsqrt lowers to the EUP.
    inv = scale * lax.rsqrt(jnp.maximum(ss, _EPS * _EPS))        # [br, 1] f32
    for s in range(0, d, _LANE_CHUNK):
        e = min(s + _LANE_CHUNK, d)
        c = x_ref[:, s:e].astype(jnp.float32)
        o_ref[:, s:e] = (c * inv).astype(o_ref.dtype)


def _rmsnorm_packed_kernel(x_ref, b_ref, o_ref, *, scale):
    """Lane-packed path for dim | 128: each packed row holds k = 128/dim
    original rows in 128 lanes.  The block-diagonal 0/1 matrix `b_ref`
    ([128,128], ones where lane_i//dim == lane_j//dim) turns one MXU matmul
    into per-group squared sums broadcast back to every lane of the group, so
    all intermediates stay lane-dense [br, 128] (no relayout, unmasked vst).
    """
    xf = x_ref[...].astype(jnp.float32)                          # [br, 128]
    ss = jnp.dot(xf * xf, b_ref[...],
                 preferred_element_type=jnp.float32)             # [br, 128]
    inv = scale * lax.rsqrt(jnp.maximum(ss, _EPS * _EPS))
    o_ref[...] = (xf * inv).astype(o_ref.dtype)


# ---------------------------------------------------------------------------
# Wrapper
# ---------------------------------------------------------------------------

def _vmem_capacity_bytes():
    try:
        return int(pltpu.get_tpu_info().vmem_capacity_bytes)
    except Exception:
        return 64 * 1024 * 1024        # conservative fallback: v7x per-TC VMEM


def _round_up(v, m):
    return ((v + m - 1) // m) * m


def _pick_row_block(rows, row_bytes, target_block_bytes):
    """Row-block size: big enough to amortize the ~0.35us per-step overhead,
    small enough that >= 2 row-blocks exist whenever rows >= 16, so
    ("parallel",) can shard the row axis across v7x's two TensorCores."""
    if rows < 2 * _SUBLANE:
        return rows                    # single full-extent block
    br_budget = max(_SUBLANE,
                    (target_block_bytes // max(1, row_bytes)) // _SUBLANE * _SUBLANE)
    n_blocks = max(2, pl.cdiv(rows, br_budget))
    if n_blocks <= 8 and n_blocks % 2:
        n_blocks += 1                  # balanced split across 2 cores when small
    return max(_SUBLANE, _round_up(pl.cdiv(rows, n_blocks), _SUBLANE))


def simple_rms_norm(x, *, target_block_bytes=None, vmem_limit_bytes=None):
    """Apply SimpleRMSNorm over the last axis of x (any leading shape)."""
    orig_shape = x.shape
    dim = int(orig_shape[-1])
    scale = float(dim) ** 0.5

    x2d = x.reshape(-1, dim)
    rows = x2d.shape[0]
    itemsize = jnp.dtype(x.dtype).itemsize

    vmem_cap = _vmem_capacity_bytes()
    if target_block_bytes is None:
        # v7x (<=64 MiB/TC, ~3.2 TB/s per TC): larger steps to amortize the
        # per-step overhead; v5e/v6e (128 MiB): 4 MiB is already at the knee.
        if vmem_cap <= 96 * 1024 * 1024:
            target_block_bytes = 6 * 1024 * 1024
        else:
            target_block_bytes = 4 * 1024 * 1024
    if vmem_limit_bytes is None:
        vmem_limit_bytes = int(vmem_cap * 3 // 4)

    compiler_params = dict(dimension_semantics=("parallel",))

    # Lane-packing fast path: dim divides 128, so k = 128/dim original rows fit
    # in one lane-dense 128-wide packed row (unmasked stores).
    packed = (dim < _LANE) and (_LANE % dim == 0) and (rows % (_LANE // dim) == 0)

    if packed:
        k = _LANE // dim
        rows_p = rows // k
        row_bytes = _LANE * itemsize
        br = _pick_row_block(rows_p, row_bytes, target_block_bytes)
        grid = (pl.cdiv(rows_p, br),)

        g = jnp.arange(_LANE, dtype=jnp.int32) // dim
        b_mat = (g[:, None] == g[None, :]).astype(jnp.float32)   # [128,128]

        out_p = pl.pallas_call(
            functools.partial(_rmsnorm_packed_kernel, scale=scale),
            out_shape=jax.ShapeDtypeStruct((rows_p, _LANE), x.dtype),
            grid_spec=pltpu.PrefetchScalarGridSpec(
                num_scalar_prefetch=0,
                grid=grid,
                in_specs=[pl.BlockSpec((br, _LANE), lambda i: (i, 0)),
                          pl.BlockSpec((_LANE, _LANE), lambda i: (0, 0))],
                out_specs=pl.BlockSpec((br, _LANE), lambda i: (i, 0)),
            ),
            compiler_params=pltpu.CompilerParams(
                vmem_limit_bytes=vmem_limit_bytes, **compiler_params),
        )(x2d.reshape(rows_p, _LANE), b_mat)
        return out_p.reshape(orig_shape)

    # General path: dim mapped to lanes as-is (masked stores only if dim is not
    # a multiple of 128 and couldn't be packed above).
    row_bytes = dim * itemsize
    # TODO(synk): a dim so wide that an 8-row block exceeds the VMEM budget
    # needs a lane-tiled 2-D grid with a carried squared-sum accumulator; here
    # we only make sure the scoped limit can hold the minimal block.
    min_resident = 8 * _SUBLANE * row_bytes          # ~double-buffered I/O + slabs
    vmem_limit_bytes = max(vmem_limit_bytes,
                           min(int(vmem_cap * 9 // 10), min_resident))

    br = _pick_row_block(rows, row_bytes, target_block_bytes)
    grid = (pl.cdiv(rows, br),)

    out2d = pl.pallas_call(
        functools.partial(_rmsnorm_kernel, scale=scale),
        out_shape=jax.ShapeDtypeStruct((rows, dim), x.dtype),
        grid_spec=pltpu.PrefetchScalarGridSpec(
            num_scalar_prefetch=0,
            grid=grid,
            in_specs=[pl.BlockSpec((br, dim), lambda i: (i, 0))],
            out_specs=pl.BlockSpec((br, dim), lambda i: (i, 0)),
        ),
        compiler_params=pltpu.CompilerParams(
            vmem_limit_bytes=vmem_limit_bytes, **compiler_params),
    )(x2d)
    return out2d.reshape(orig_shape)


# ---------------------------------------------------------------------------
# Reference + demo
# ---------------------------------------------------------------------------

def _reference(x):
    xf = x.astype(jnp.float32)
    norm = jnp.sqrt(jnp.sum(xf * xf, axis=-1, keepdims=True))
    return (xf / jnp.maximum(norm, _EPS) * (x.shape[-1] ** 0.5)).astype(x.dtype)


if __name__ == "__main__":
    key = jax.random.PRNGKey(0)

    # Main demo: packed fast path (dim=32 -> 4 rows per 128-lane packed row).
    batch, seq, hidden = 2, 8, 32
    x = jax.random.normal(key, (batch, seq, hidden), dtype=jnp.float32)
    out = jax.block_until_ready(simple_rms_norm(x))
    assert out.shape == x.shape and out.dtype == x.dtype
    assert jnp.allclose(out, _reference(x), atol=1e-5, rtol=1e-5)

    # General path, multi-block ragged rows (rows % 4 != 0 disables packing).
    x2 = jax.random.normal(key, (3, 37, hidden), dtype=jnp.float32)
    out2 = jax.block_until_ready(
        simple_rms_norm(x2, target_block_bytes=8 * hidden * 4))
    assert jnp.allclose(out2, _reference(x2), atol=1e-5, rtol=1e-5)

    # General path, lane-dense dim=128, bf16, forced >=2 row-blocks (rows=64).
    x3 = jax.random.normal(key, (4, 16, 128), dtype=jnp.bfloat16)
    out3 = jax.block_until_ready(simple_rms_norm(x3))
    assert jnp.allclose(out3.astype(jnp.float32),
                        _reference(x3).astype(jnp.float32),
                        atol=2e-2, rtol=2e-2)

    # Packed path with >=2 row-blocks (rows_p = 32 >= 16).
    x4 = jax.random.normal(key, (2, 64, 32), dtype=jnp.float32)
    out4 = jax.block_until_ready(simple_rms_norm(x4))
    assert jnp.allclose(out4, _reference(x4), atol=1e-5, rtol=1e-5)

    print("KERNEL_OK")
</pallas_src>

<mosaic_0001>
module attributes {stable_mosaic.version = 11 : i64} {
  func.func @_rmsnorm_packed_kernel(%arg0: i32, %arg1: memref<4x128xf32, #tpu.memory_space<vmem>>, %arg2: memref<128x128xf32, #tpu.memory_space<vmem>>, %arg3: memref<4x128xf32, #tpu.memory_space<vmem>>) attributes {dimension_semantics = [#tpu.dimension_semantics<parallel>], iteration_bounds = array<i64: 1>, scalar_prefetch = 0 : i64, scratch_operands = 0 : i64, tpu.core_type = #tpu.core_type<tc>, window_params = [{transform_indices = @transform_0, window_bounds = array<i64: 4, 128>}, {pipeline_mode = #tpu.pipeline_mode<synchronous>, transform_indices = @transform_1, window_bounds = array<i64: 128, 128>}, {transform_indices = @transform_2, window_bounds = array<i64: 4, 128>}]} {
    %c0 = arith.constant 0 : index
    %c0_0 = arith.constant 0 : index
    %0 = vector.load %arg1[%c0, %c0_0] : memref<4x128xf32, #tpu.memory_space<vmem>>, vector<4x128xf32>
    %1 = arith.mulf %0, %0 : vector<4x128xf32>
    %c0_1 = arith.constant 0 : index
    %c0_2 = arith.constant 0 : index
    %2 = vector.load %arg2[%c0_1, %c0_2] : memref<128x128xf32, #tpu.memory_space<vmem>>, vector<128x128xf32>
    %cst = arith.constant dense<0.000000e+00> : vector<4x128xf32>
    %3 = tpu.matmul %1, %2, %cst {dimension_numbers = #tpu.dot_dimension_numbers<[1], [0], [0], [1], [0, 0, 1, 1], [], []>} : vector<4x128xf32>, vector<128x128xf32>, vector<4x128xf32> -> vector<4x128xf32>
    %cst_3 = arith.constant 1.000000e-24 : f32
    %4 = vector.broadcast %cst_3 : f32 to vector<4x128xf32>
    %5 = arith.maximumf %3, %4 : vector<4x128xf32>
    %6 = math.rsqrt %5 : vector<4x128xf32>
    %cst_4 = arith.constant 5.65685415 : f32
    %7 = vector.broadcast %cst_4 : f32 to vector<4x128xf32>
    %8 = arith.mulf %7, %6 : vector<4x128xf32>
    %9 = arith.mulf %0, %8 : vector<4x128xf32>
    %c0_5 = arith.constant 0 : index
    %c0_6 = arith.constant 0 : index
    %10 = vector.load %arg3[%c0_5, %c0_6] : memref<4x128xf32, #tpu.memory_space<vmem>>, vector<4x128xf32>
    tpu.vector_store %arg3[%c0_5, %c0_6], %9 {strides = array<i32>} : memref<4x128xf32, #tpu.memory_space<vmem>>, vector<4x128xf32>,
    return
  }
  func.func @transform_0(%arg0: i32) -> (i32, i32) {
    %c0_i32 = arith.constant 0 : i32
    %c0_i32_0 = arith.constant 0 : i32
    return %arg0, %c0_i32 : i32, i32
  }
  func.func @transform_1(%arg0: i32) -> (i32, i32) {
    %c0_i32 = arith.constant 0 : i32
    %c0_i32_0 = arith.constant 0 : i32
    %c0_i32_1 = arith.constant 0 : i32
    return %c0_i32, %c0_i32_0 : i32, i32
  }
  func.func @transform_2(%arg0: i32) -> (i32, i32) {
    %c0_i32 = arith.constant 0 : i32
    %c0_i32_0 = arith.constant 0 : i32
    return %arg0, %c0_i32 : i32, i32
  }
}

</mosaic_0001>

<llo_original>
// kernel: tpu_custom_call.1
$region0: #{tpu_custom_call.1}
  #allocation0 [shape = 'u32[]', space=smem, size = 0x4, offset = 0x4, fixed_abs, tag = 'smem constant byte address 0x4 - core index']
  #allocation1 [shape = 'u32[144,128]{1,0:T(1,128)}', space=vmem, size = 0x12000, scoped, tag = 'internal scratch']
  %s0 = inlined_call_operand.hbm [shape: f32[4,128], index: 0, kind: input, shape index: {}]
  %s1 = inlined_call_operand.hbm [shape: f32[128,128], index: 1, kind: input, shape index: {}]
  %s2 = inlined_call_operand.hbm [shape: f32[4,128], index: 2, kind: output, shape index: {}]
  %s3 = sld [smem:[#allocation0]]
  $region26: #{tpu_custom_call.1} parent=0
    _
  %s5 = ssub.s32 1, %s3
  %s6 = scalar_select 0, %s5, %s3
  $region1: #{tpu_custom_call.1} parent=0
    #allocation2 [shape = 'u8[2048]{0}', space=vmem, size = 0x800, scoped, tag = 'input window, operand 0, single buffered']
    #allocation3 [shape = 's32[1]{0}', space=sflag, size = 0x4, scoped, tag = 'scoped memory for tpu_custom_call.1']
    #allocation4 [shape = 's32[1]{0}', space=sflag, size = 0x4, scoped, tag = 'scoped memory for tpu_custom_call.1']
    #allocation5 [shape = 'u8[65536]{0}', space=vmem, size = 0x10000, scoped, tag = 'input window, operand 1, single buffered']
    #allocation6 [shape = 's32[1]{0}', space=sflag, size = 0x4, scoped, tag = 'scoped memory for tpu_custom_call.1']
    #allocation7 [shape = 'u8[2048]{0}', space=vmem, size = 0x800, scoped, tag = 'output window, operand 0, single buffered']
    %7 = vsyncpa [#allocation3], 0
    %8 = vsyncpa [#allocation6], 0
    %9 = vsyncpa [#allocation4], 0
    // Predicated region
    $region2: #{tpu_custom_call.1} parent=1 // pred_check
      _
    $region3: #{tpu_custom_call.1} parent=1 // pred_check_branch
      %11 = sbr.rel (0) target = $region5
    $region4: #{tpu_custom_call.1} parent=1 // pred_region
      %s13 = ssub.s32 64, 64
      %14 = vsyncadd [#allocation3], %s13
      %s16 = sshll.u32 [#allocation2], 4
      %s17 = int_to_ptr.vmem [resolvable:$true] %s16
      %19 = dma.hbm_to_vmem [thread:$0]  %s0, 64, %s17, [#allocation3]
    $region5: #{tpu_custom_call.1} parent=1 // pred_fallthru
      _
    // Predicated region
    $region6: #{tpu_custom_call.1} parent=1 // pred_check
      _
    $region7: #{tpu_custom_call.1} parent=1 // pred_check_branch
      %21 = sbr.rel (0) target = $region9
    $region8: #{tpu_custom_call.1} parent=1 // pred_region
      %s23 = ssub.s32 2048, 2048
      %24 = vsyncadd [#allocation6], %s23
      %s25 = sshll.u32 [#allocation5], 4
      %s26 = int_to_ptr.vmem [resolvable:$true] %s25
      %31 = dma.hbm_to_vmem [thread:$0]  %s1, 2048, %s26, [#allocation6], 128, 128, 8
    $region9: #{tpu_custom_call.1} parent=1 // pred_fallthru
      _
    // Predicated region
    $region10: #{tpu_custom_call.1} parent=1 // pred_check
      _
    $region11: #{tpu_custom_call.1} parent=1 // pred_check_branch
      %33 = sbr.rel (0) target = $region13
    $region12: #{tpu_custom_call.1} parent=1 // pred_region
      %34 = dma.done [#allocation3], 64
    $region13: #{tpu_custom_call.1} parent=1 // pred_fallthru
      _
    // Predicated region
    $region14: #{tpu_custom_call.1} parent=1 // pred_check
      _
    $region15: #{tpu_custom_call.1} parent=1 // pred_check_branch
      %36 = sbr.rel (0) target = $region17
    $region16: #{tpu_custom_call.1} parent=1 // pred_region
      %37 = dma.done [#allocation6], 2048
    $region17: #{tpu_custom_call.1} parent=1 // pred_fallthru
      _
    %v38 = vld [vmem:[#allocation2] sm:$0xf]
    %v39 = vmul.f32 %v38, %v38
    %v40 = vld [vmem:[#allocation5] sm:$0xff]
    %v41 = vld [vmem:[#allocation5 + $0x8] sm:$0xff]
    %v42 = vld [vmem:[#allocation5 + $0x10] sm:$0xff]
    %v43 = vld [vmem:[#allocation5 + $0x18] sm:$0xff]
    %v44 = vld [vmem:[#allocation5 + $0x20] sm:$0xff]
    %v45 = vld [vmem:[#allocation5 + $0x28] sm:$0xff]
    %v46 = vld [vmem:[#allocation5 + $0x30] sm:$0xff]
    %v47 = vld [vmem:[#allocation5 + $0x38] sm:$0xff]
    %v48 = vld [vmem:[#allocation5 + $0x40] sm:$0xff]
    %v49 = vld [vmem:[#allocation5 + $0x48] sm:$0xff]
    %v50 = vld [vmem:[#allocation5 + $0x50] sm:$0xff]
    %v51 = vld [vmem:[#allocation5 + $0x58] sm:$0xff]
    %v52 = vld [vmem:[#allocation5 + $0x60] sm:$0xff]
    %v53 = vld [vmem:[#allocation5 + $0x68] sm:$0xff]
    %v54 = vld [vmem:[#allocation5 + $0x70] sm:$0xff]
    %v55 = vld [vmem:[#allocation5 + $0x78] sm:$0xff]
    %56 = vmatprep.subr.mxu0 0.0
    %57 = vmatpush1.msra.mxu0 %v55
    %58 = vmatprep.subr.mxu0 0.0
    %59 = vmatpush1.msra.mxu0 %v54
    %60 = vmatprep.subr.mxu0 0.0
    %61 = vmatpush1.msra.mxu0 %v53
    %62 = vmatprep.subr.mxu0 0.0
    %63 = vmatpush1.msra.mxu0 %v52
    %64 = vmatprep.subr.mxu0 0.0
    %65 = vmatpush1.msra.mxu0 %v51
    %66 = vmatprep.subr.mxu0 0.0
    %67 = vmatpush1.msra.mxu0 %v50
    %68 = vmatprep.subr.mxu0 0.0
    %69 = vmatpush1.msra.mxu0 %v49
    %70 = vmatprep.subr.mxu0 0.0
    %71 = vmatpush1.msra.mxu0 %v48
    %72 = vmatprep.subr.mxu0 0.0
    %73 = vmatpush1.msra.mxu0 %v47
    %74 = vmatprep.subr.mxu0 0.0
    %75 = vmatpush1.msra.mxu0 %v46
    %76 = vmatprep.subr.mxu0 0.0
    %77 = vmatpush1.msra.mxu0 %v45
    %78 = vmatprep.subr.mxu0 0.0
    %79 = vmatpush1.msra.mxu0 %v44
    %80 = vmatprep.subr.mxu0 0.0
    %81 = vmatpush1.msra.mxu0 %v43
    %82 = vmatprep.subr.mxu0 0.0
    %83 = vmatpush1.msra.mxu0 %v42
    %84 = vmatprep.subr.mxu0 0.0
    %85 = vmatpush1.msra.mxu0 %v41
    %86 = vmatprep.subr.mxu0 0.0
    %87 = vmatpush1.msra.mxu0 %v40
    %88 = vmatprep.subr.mxu0 0.0
    %89 = vmatpush2.msra.mxu0 0.0
    %90 = vmatprep.subr.mxu0 0.0
    %91 = vmatpush2.msra.mxu0 0.0
    %92 = vmatprep.subr.mxu0 0.0
    %93 = vmatpush2.msra.mxu0 0.0
    %94 = vmatprep.subr.mxu0 0.0
    %95 = vmatpush2.msra.mxu0 0.0
    %96 = vmatprep.subr.mxu0 0.0
    %97 = vmatpush2.msra.mxu0 0.0
    %98 = vmatprep.subr.mxu0 0.0
    %99 = vmatpush2.msra.mxu0 0.0
    %100 = vmatprep.subr.mxu0 0.0
    %101 = vmatpush2.msra.mxu0 0.0
    %102 = vmatprep.subr.mxu0 0.0
    %103 = vmatpush2.msra.mxu0 0.0
    %104 = vmatprep.subr.mxu0 0.0
    %105 = vmatpush2.msra.mxu0 0.0
    %106 = vmatprep.subr.mxu0 0.0
    %107 = vmatpush2.msra.mxu0 0.0
    %108 = vmatprep.subr.mxu0 0.0
    %109 = vmatpush2.msra.mxu0 0.0
    %110 = vmatprep.subr.mxu0 0.0
    %111 = vmatpush2.msra.mxu0 0.0
    %112 = vmatprep.subr.mxu0 0.0
    %113 = vmatpush2.msra.mxu0 0.0
    %114 = vmatprep.subr.mxu0 0.0
    %115 = vmatpush2.msra.mxu0 0.0
    %116 = vmatprep.subr.mxu0 0.0
    %117 = vmatpush2.msra.mxu0 0.0
    %118 = vmatprep.subr.mxu0 0.0
    %119 = vmatpush2.msra.mxu0 0.0
    %120 = vmatprep.mubr.f32.mxu0 0.0
    %121 = vmatmul.mubr.f32.gmra.mxu0 %v39
    %v122 = vpop.f32.mrf.mxu0
    %v123 = vadd.f32 0.0, %v122
    %v124 = vpop.f32.mrf.mxu0
    %125 = vdwg.mxu0
    %v126 = vmax.f32 %v123, 1e-24
    %v127 = vrsqrt.pop %v126
    %v128 = vmul.f32 %v127, 5.656854
    %v129 = vmul.f32 %v38, %v128
    %130 = vst [vmem:[#allocation7] sm:$0xf] %v129
    // Predicated region
    $region18: #{tpu_custom_call.1} parent=1 // pred_check
      _
    $region19: #{tpu_custom_call.1} parent=1 // pred_check_branch
      %132 = sbr.rel (0) target = $region21
    $region20: #{tpu_custom_call.1} parent=1 // pred_region
      %s134 = ssub.s32 64, 64
      %135 = vsyncadd [#allocation4], %s134
      %s137 = sshll.u32 [#allocation7], 4
      %s138 = int_to_ptr.vmem [resolvable:$true] %s137
      %140 = dma.vmem_to_hbm [thread:$0]  %s138, 64, %s2, [#allocation4]
    $region21: #{tpu_custom_call.1} parent=1 // pred_fallthru
      _
    // Predicated region
    $region22: #{tpu_custom_call.1} parent=1 // pred_check
      _
    $region23: #{tpu_custom_call.1} parent=1 // pred_check_branch
      %142 = sbr.rel (0) target = $region25
    $region24: #{tpu_custom_call.1} parent=1 // pred_region
      %143 = dma.done [#allocation4], 64
    $region25: #{tpu_custom_call.1} parent=1 // pred_fallthru
      _
    %144 = vsyncpa [#allocation3], 1
    %145 = vsyncpa [#allocation6], 1
    %146 = vsyncpa [#allocation4], 1

</llo_original>
